<compile_context>
chip_gen: v5e
topology: v5e:2x2
jax: 0.10.0
libtpu: 0.0.40
codegen_flags: <defaults>
</compile_context>

<pallas_src>
import jax
import jax.numpy as jnp
from jax.experimental import pallas as pl
from jax.experimental.pallas import tpu as pltpu

H1 = 256        # first hidden width
H2 = 64         # second hidden width (logical, as in the PyTorch module)
H2_PAD = 128    # lane-padded second hidden width (zero padding -> exact math)


def _round_up(x, m):
    return ((x + m - 1) // m) * m


def critic_kernel(x_ref, w1_ref, b1_ref, w2_ref, b2_ref, w3_ref, b3_ref, o_ref):
    # Layer 1: single fused matmul, K = S+A (concat + bf16 cast done in wrapper).
    h1 = jnp.dot(x_ref[...], w1_ref[...],
                 preferred_element_type=jnp.float32)                  # [TB, 256]
    h1 = jnp.maximum(h1 + b1_ref[...], 0.0)                           # f32 epilogue

    # Layer 2: hidden dim zero-padded 64 -> 128 so h2 is lane-dense.
    h2 = jnp.dot(h1.astype(jnp.bfloat16), w2_ref[...],
                 preferred_element_type=jnp.float32)                  # [TB, 128]
    h2 = jnp.maximum(h2 + b2_ref[...], 0.0)

    # Layer 3 (out_features = 1): VPU multiply + lane reduce (XLU) instead of a
    # wasteful 1-column MXU matmul.  Padded lanes of w3 are zero -> exact.
    h3 = jnp.sum(h2 * w3_ref[...], axis=-1, keepdims=True) + b3_ref[...]  # [TB, 1]

    # Lane-dense output row: unmasked vector stores / contiguous output DMA.
    o_ref[...] = h3.T.astype(o_ref.dtype)                             # [1, TB]


def critic_forward(state, action, kparams, *, block_b=1024):
    """state: [B, S], action: [B, A] -> value: [B, 1] (f32)."""
    assert block_b % 128 == 0, "block_b must be a multiple of 128"
    w1, b1, w2, b2, w3_row, b3 = kparams
    B, S = state.shape
    A = action.shape[1]
    K = S + A

    # torch.cat + bf16 cast done once here (B*K bf16 bytes -- negligible HBM),
    # so the kernel runs a single K=S+A matmul for layer 1.
    x = jnp.concatenate([state, action], axis=1).astype(jnp.bfloat16)  # [B, S+A]

    # Batch tile: == B for small batches (single tile, block == full dims);
    # otherwise a multiple of 128 sized so the grid has >=2 steps (v7x megacore)
    # while staying as large as possible (amortize ~0.35us/step pipeline cost).
    if B <= 128:
        TB = B
    else:
        TB = min(block_b, _round_up(pl.cdiv(B, 2), 128))
    grid = (pl.cdiv(B, TB),)

    resident = lambda i: (0, 0)                   # weights/biases stay in VMEM

    flops = 2 * B * (K * H1 + H1 * H2_PAD + H2_PAD)
    bytes_accessed = (
        2 * B * K + 4 * B                                  # bf16 inputs + f32 output
        + 2 * (K * H1 + H1 * H2_PAD)                       # bf16 weights
        + 4 * (H1 + H2_PAD + H2_PAD + 1))                  # f32 biases + w3 row

    out = pl.pallas_call(
        critic_kernel,
        out_shape=jax.ShapeDtypeStruct((1, B), jnp.float32),
        grid=grid,
        in_specs=[
            pl.BlockSpec((TB, K), lambda i: (i, 0)),   # x = [state|action] (bf16)
            pl.BlockSpec((K, H1), resident),           # w1        (bf16)
            pl.BlockSpec((1, H1), resident),           # b1        (f32)
            pl.BlockSpec((H1, H2_PAD), resident),      # w2 padded (bf16)
            pl.BlockSpec((1, H2_PAD), resident),       # b2 padded (f32)
            pl.BlockSpec((1, H2_PAD), resident),       # w3 row    (f32)
            pl.BlockSpec((1, 1), resident),            # b3        (f32)
        ],
        out_specs=pl.BlockSpec((1, TB), lambda i: (0, i)),
        compiler_params=pltpu.CompilerParams(
            dimension_semantics=("parallel",),         # shard batch tiles on v7x
            vmem_limit_bytes=32 * 1024 * 1024,
        ),
        cost_estimate=pl.CostEstimate(
            flops=flops, transcendentals=0, bytes_accessed=bytes_accessed),
    )(x, w1, b1, w2, b2, w3_row, b3)

    return out.reshape(B, 1)


def init_params(key, state_dim, action_dim):
    """f32 parameters matching the nn.Linear shapes (weights stored as (in, out))."""
    in_dim = state_dim + action_dim
    ks = jax.random.split(key, 6)

    def unif(k, shape, fan_in):
        bound = 1.0 / jnp.sqrt(fan_in)
        return jax.random.uniform(k, shape, jnp.float32, -bound, bound)

    w1 = unif(ks[0], (in_dim, H1), in_dim)
    b1 = unif(ks[1], (1, H1), in_dim)
    w2 = unif(ks[2], (H1, H2), H1)
    b2 = unif(ks[3], (1, H2), H1)
    w3 = unif(ks[4], (H2, 1), H2)
    b3 = unif(ks[5], (1, 1), H2)
    return (w1, b1, w2, b2, w3, b3)


def prepare_kernel_params(params):
    """Zero-pad / cast the f32 params into the kernel's layout."""
    w1, b1, w2, b2, w3, b3 = params
    w1_bf = w1.astype(jnp.bfloat16)                                     # [S+A, 256]
    w2_p = jnp.zeros((H1, H2_PAD), jnp.bfloat16).at[:, :H2].set(
        w2.astype(jnp.bfloat16))                                        # [256, 128]
    b2_p = jnp.zeros((1, H2_PAD), jnp.float32).at[:, :H2].set(b2)       # [1, 128]
    w3_row = jnp.zeros((1, H2_PAD), jnp.float32).at[:, :H2].set(w3.T)   # [1, 128]
    return (w1_bf, b1.astype(jnp.float32), w2_p, b2_p, w3_row,
            b3.astype(jnp.float32))


def critic_reference(state, action, params):
    w1, b1, w2, b2, w3, b3 = params
    x = jnp.concatenate([state, action], axis=1)
    x = jnp.maximum(x @ w1 + b1, 0.0)
    x = jnp.maximum(x @ w2 + b2, 0.0)
    return x @ w3 + b3


if __name__ == "__main__":
    state_dim, action_dim = 8, 4

    key = jax.random.PRNGKey(0)
    k_s, k_a, k_p = jax.random.split(key, 3)
    params = init_params(k_p, state_dim, action_dim)
    kparams = prepare_kernel_params(params)

    # Small-batch check (single tile, block == full dims).
    B = 2
    state = jax.random.normal(k_s, (B, state_dim), jnp.float32)
    action = jax.random.normal(k_a, (B, action_dim), jnp.float32)
    value = jax.block_until_ready(critic_forward(state, action, kparams))
    ref = critic_reference(state, action, params)
    assert value.shape == (B, 1)
    # bf16 MXU operands (f32 accumulation) vs. full-f32 reference -> looser tol.
    assert jnp.allclose(value, ref, atol=5e-2, rtol=5e-2), (value, ref)

    # Multi-tile check: non-divisible batch exercises the >=2-tile grid and the
    # masked partial last tile of the lane-dense output path.
    B2 = 200
    state2 = jax.random.normal(k_s, (B2, state_dim), jnp.float32)
    action2 = jax.random.normal(k_a, (B2, action_dim), jnp.float32)
    value2 = jax.block_until_ready(critic_forward(state2, action2, kparams))
    ref2 = critic_reference(state2, action2, params)
    assert value2.shape == (B2, 1)
    assert jnp.allclose(value2, ref2, atol=5e-2, rtol=5e-2)

    print("KERNEL_OK")
</pallas_src>

<mosaic_0001>
module attributes {stable_mosaic.version = 11 : i64} {
  func.func @critic_kernel(%arg0: i32, %arg1: memref<2x12xbf16, #tpu.memory_space<vmem>>, %arg2: memref<12x256xbf16, #tpu.memory_space<vmem>>, %arg3: memref<1x256xf32, #tpu.memory_space<vmem>>, %arg4: memref<256x128xbf16, #tpu.memory_space<vmem>>, %arg5: memref<1x128xf32, #tpu.memory_space<vmem>>, %arg6: memref<1x128xf32, #tpu.memory_space<vmem>>, %arg7: memref<1x1xf32, #tpu.memory_space<vmem>>, %arg8: memref<1x2xf32, #tpu.memory_space<vmem>>) attributes {dimension_semantics = [#tpu.dimension_semantics<parallel>], iteration_bounds = array<i64: 1>, scalar_prefetch = 0 : i64, scratch_operands = 0 : i64, tpu.core_type = #tpu.core_type<tc>, window_params = [{transform_indices = @transform_0, window_bounds = array<i64: 2, 12>}, {pipeline_mode = #tpu.pipeline_mode<synchronous>, transform_indices = @transform_1, window_bounds = array<i64: 12, 256>}, {pipeline_mode = #tpu.pipeline_mode<synchronous>, transform_indices = @transform_2, window_bounds = array<i64: 1, 256>}, {pipeline_mode = #tpu.pipeline_mode<synchronous>, transform_indices = @transform_3, window_bounds = array<i64: 256, 128>}, {pipeline_mode = #tpu.pipeline_mode<synchronous>, transform_indices = @transform_4, window_bounds = array<i64: 1, 128>}, {pipeline_mode = #tpu.pipeline_mode<synchronous>, transform_indices = @transform_5, window_bounds = array<i64: 1, 128>}, {pipeline_mode = #tpu.pipeline_mode<synchronous>, transform_indices = @transform_6, window_bounds = array<i64: 1, 1>}, {transform_indices = @transform_7, window_bounds = array<i64: 1, 2>}]} {
    %c0 = arith.constant 0 : index
    %c0_0 = arith.constant 0 : index
    %0 = vector.load %arg1[%c0, %c0_0] : memref<2x12xbf16, #tpu.memory_space<vmem>>, vector<2x12xbf16>
    %c0_1 = arith.constant 0 : index
    %c0_2 = arith.constant 0 : index
    %1 = vector.load %arg2[%c0_1, %c0_2] : memref<12x256xbf16, #tpu.memory_space<vmem>>, vector<12x256xbf16>
    %cst = arith.constant dense<0.000000e+00> : vector<2x256xf32>
    %2 = tpu.matmul %0, %1, %cst {dimension_numbers = #tpu.dot_dimension_numbers<[1], [0], [0], [1], [0, 0, 1, 1], [], []>} : vector<2x12xbf16>, vector<12x256xbf16>, vector<2x256xf32> -> vector<2x256xf32>
    %c0_3 = arith.constant 0 : index
    %c0_4 = arith.constant 0 : index
    %3 = vector.load %arg3[%c0_3, %c0_4] : memref<1x256xf32, #tpu.memory_space<vmem>>, vector<1x256xf32>
    %4 = vector.broadcast %3 : vector<1x256xf32> to vector<2x256xf32>
    %5 = arith.addf %2, %4 : vector<2x256xf32>
    %cst_5 = arith.constant 0.000000e+00 : f32
    %6 = vector.broadcast %cst_5 : f32 to vector<2x256xf32>
    %7 = arith.maximumf %5, %6 : vector<2x256xf32>
    %8 = arith.truncf %7 : vector<2x256xf32> to vector<2x256xbf16>
    %c0_6 = arith.constant 0 : index
    %c0_7 = arith.constant 0 : index
    %9 = vector.load %arg4[%c0_6, %c0_7] : memref<256x128xbf16, #tpu.memory_space<vmem>>, vector<256x128xbf16>
    %cst_8 = arith.constant dense<0.000000e+00> : vector<2x128xf32>
    %10 = tpu.matmul %8, %9, %cst_8 {dimension_numbers = #tpu.dot_dimension_numbers<[1], [0], [0], [1], [0, 0, 1, 1], [], []>} : vector<2x256xbf16>, vector<256x128xbf16>, vector<2x128xf32> -> vector<2x128xf32>
    %c0_9 = arith.constant 0 : index
    %c0_10 = arith.constant 0 : index
    %11 = vector.load %arg5[%c0_9, %c0_10] : memref<1x128xf32, #tpu.memory_space<vmem>>, vector<1x128xf32>
    %12 = vector.broadcast %11 : vector<1x128xf32> to vector<2x128xf32>
    %13 = arith.addf %10, %12 : vector<2x128xf32>
    %cst_11 = arith.constant 0.000000e+00 : f32
    %14 = vector.broadcast %cst_11 : f32 to vector<2x128xf32>
    %15 = arith.maximumf %13, %14 : vector<2x128xf32>
    %c0_12 = arith.constant 0 : index
    %c0_13 = arith.constant 0 : index
    %16 = vector.load %arg6[%c0_12, %c0_13] : memref<1x128xf32, #tpu.memory_space<vmem>>, vector<1x128xf32>
    %17 = vector.broadcast %16 : vector<1x128xf32> to vector<2x128xf32>
    %18 = arith.mulf %15, %17 : vector<2x128xf32>
    %cst_14 = arith.constant dense<0.000000e+00> : vector<2xf32>
    %19 = vector.multi_reduction <add>, %18, %cst_14 [1] : vector<2x128xf32> to vector<2xf32>
    %20 = vector.shape_cast %19 : vector<2xf32> to vector<2x1xf32>
    %c0_15 = arith.constant 0 : index
    %c0_16 = arith.constant 0 : index
    %21 = vector.load %arg7[%c0_15, %c0_16] : memref<1x1xf32, #tpu.memory_space<vmem>>, vector<1x1xf32>
    %22 = vector.broadcast %21 : vector<1x1xf32> to vector<2x1xf32>
    %23 = arith.addf %20, %22 : vector<2x1xf32>
    %24 = tpu.transpose %23, [1, 0] : vector<2x1xf32> -> vector<1x2xf32>
    %c0_17 = arith.constant 0 : index
    %c0_18 = arith.constant 0 : index
    %25 = vector.load %arg8[%c0_17, %c0_18] : memref<1x2xf32, #tpu.memory_space<vmem>>, vector<1x2xf32>
    tpu.vector_store %arg8[%c0_17, %c0_18], %24 {strides = array<i32>} : memref<1x2xf32, #tpu.memory_space<vmem>>, vector<1x2xf32>,
    return
  }
  func.func @transform_0(%arg0: i32) -> (i32, i32) {
    %c0_i32 = arith.constant 0 : i32
    %c0_i32_0 = arith.constant 0 : i32
    return %arg0, %c0_i32 : i32, i32
  }
  func.func @transform_1(%arg0: i32) -> (i32, i32) {
    %c0_i32 = arith.constant 0 : i32
    %c0_i32_0 = arith.constant 0 : i32
    %c0_i32_1 = arith.constant 0 : i32
    return %c0_i32, %c0_i32_0 : i32, i32
  }
  func.func @transform_2(%arg0: i32) -> (i32, i32) {
    %c0_i32 = arith.constant 0 : i32
    %c0_i32_0 = arith.constant 0 : i32
    %c0_i32_1 = arith.constant 0 : i32
    return %c0_i32, %c0_i32_0 : i32, i32
  }
  func.func @transform_3(%arg0: i32) -> (i32, i32) {
    %c0_i32 = arith.constant 0 : i32
    %c0_i32_0 = arith.constant 0 : i32
    %c0_i32_1 = arith.constant 0 : i32
    return %c0_i32, %c0_i32_0 : i32, i32
  }
  func.func @transform_4(%arg0: i32) -> (i32, i32) {
    %c0_i32 = arith.constant 0 : i32
    %c0_i32_0 = arith.constant 0 : i32
    %c0_i32_1 = arith.constant 0 : i32
    return %c0_i32, %c0_i32_0 : i32, i32
  }
  func.func @transform_5(%arg0: i32) -> (i32, i32) {
    %c0_i32 = arith.constant 0 : i32
    %c0_i32_0 = arith.constant 0 : i32
    %c0_i32_1 = arith.constant 0 : i32
    return %c0_i32, %c0_i32_0 : i32, i32
  }
  func.func @transform_6(%arg0: i32) -> (i32, i32) {
    %c0_i32 = arith.constant 0 : i32
    %c0_i32_0 = arith.constant 0 : i32
    %c0_i32_1 = arith.constant 0 : i32
    return %c0_i32, %c0_i32_0 : i32, i32
  }
  func.func @transform_7(%arg0: i32) -> (i32, i32) {
    %c0_i32 = arith.constant 0 : i32
    %c0_i32_0 = arith.constant 0 : i32
    return %c0_i32, %arg0 : i32, i32
  }
}

</mosaic_0001>

<llo_original>
// kernel: tpu_custom_call.1
$region0: #{tpu_custom_call.1}
  #allocation0 [shape = 'u32[]', space=smem, size = 0x4, offset = 0x4, fixed_abs, tag = 'smem constant byte address 0x4 - core index']
  #allocation1 [shape = 'u32[72,128]{1,0:T(1,128)}', space=vmem, size = 0x9000, scoped, tag = 'internal scratch']
  #allocation2 [shape = 'f32[1,1]{1,0:T(1,128)S(1)}', space=vmem, size = 0x200, scoped, tag = 'scoped memory for tpu_custom_call.1']
  %s0 = inlined_call_operand.vmem [shape: bf16[2,12], index: 0, kind: input, shape index: {}]
  %s1 = inlined_call_operand.hbm [shape: bf16[12,256], index: 1, kind: input, shape index: {}]
  %s2 = inlined_call_operand.vmem [shape: f32[1,256], index: 2, kind: input, shape index: {}]
  %s3 = inlined_call_operand.hbm [shape: bf16[256,128], index: 3, kind: input, shape index: {}]
  %s4 = inlined_call_operand.vmem [shape: f32[1,128], index: 4, kind: input, shape index: {}]
  %s5 = inlined_call_operand.vmem [shape: f32[1,128], index: 5, kind: input, shape index: {}]
  %s6 = inlined_call_operand.<no memory space> [shape: f32[1,1], index: 6, kind: input, shape index: {}]
  %s7 = inlined_call_operand.hbm [shape: f32[1,2], index: 7, kind: output, shape index: {}]
  %s8 = sld [smem:[#allocation0]]
  $region46: #{tpu_custom_call.1} parent=0
    _
  %s10 = ssub.s32 1, %s8
  %s11 = scalar_select 0, %s10, %s8
  %v12 = vstv %s6
  %13 = vst [vmem:[#allocation2] sm:$0x1] %v12
  $region1: #{tpu_custom_call.1} parent=0
    #allocation3 [shape = 'u8[8192]{0}', space=vmem, size = 0x2000, scoped, tag = 'input window, operand 1, single buffered']
    #allocation4 [shape = 's32[1]{0}', space=sflag, size = 0x4, scoped, tag = 'scoped memory for tpu_custom_call.1']
    #allocation5 [shape = 's32[1]{0}', space=sflag, size = 0x4, scoped, tag = 'scoped memory for tpu_custom_call.1']
    #allocation6 [shape = 'u8[65536]{0}', space=vmem, size = 0x10000, scoped, tag = 'input window, operand 3, single buffered']
    #allocation7 [shape = 's32[1]{0}', space=sflag, size = 0x4, scoped, tag = 'scoped memory for tpu_custom_call.1']
    #allocation8 [shape = 'u8[512]{0}', space=vmem, size = 0x400, scoped, tag = 'output window, operand 0, single buffered']
    %14 = vsyncpa [#allocation4], 0
    %15 = vsyncpa [#allocation7], 0
    %16 = vsyncpa [#allocation5], 0
    // Predicated region
    $region2: #{tpu_custom_call.1} parent=1 // pred_check
      _
    $region3: #{tpu_custom_call.1} parent=1 // pred_check_branch
      %18 = sbr.rel (0) target = $region5
    $region4: #{tpu_custom_call.1} parent=1 // pred_region
      _
    $region5: #{tpu_custom_call.1} parent=1 // pred_fallthru
      _
    // Predicated region
    $region6: #{tpu_custom_call.1} parent=1 // pred_check
      _
    $region7: #{tpu_custom_call.1} parent=1 // pred_check_branch
      %20 = sbr.rel (0) target = $region9
    $region8: #{tpu_custom_call.1} parent=1 // pred_region
      %22 = vsyncadd [#allocation4], 0
      %s23 = sshll.u32 %s1, 4
      %s24 = int_to_ptr.hbm [resolvable:$true] %s23
      %s25 = sshll.u32 [#allocation3], 4
      %s26 = int_to_ptr.vmem [resolvable:$true] %s25
      %31 = dma.hbm_to_vmem [thread:$0]  %s24, 256, %s26, [#allocation4], 128, 128, 8
    $region9: #{tpu_custom_call.1} parent=1 // pred_fallthru
      _
    // Predicated region
    $region10: #{tpu_custom_call.1} parent=1 // pred_check
      _
    $region11: #{tpu_custom_call.1} parent=1 // pred_check_branch
      %33 = sbr.rel (0) target = $region13
    $region12: #{tpu_custom_call.1} parent=1 // pred_region
      _
    $region13: #{tpu_custom_call.1} parent=1 // pred_fallthru
      _
    // Predicated region
    $region14: #{tpu_custom_call.1} parent=1 // pred_check
      _
    $region15: #{tpu_custom_call.1} parent=1 // pred_check_branch
      %35 = sbr.rel (0) target = $region17
    $region16: #{tpu_custom_call.1} parent=1 // pred_region
      %37 = vsyncadd [#allocation7], 0
      %s38 = sshll.u32 %s3, 4
      %s39 = int_to_ptr.hbm [resolvable:$true] %s38
      %s40 = sshll.u32 [#allocation6], 4
      %s41 = int_to_ptr.vmem [resolvable:$true] %s40
      %46 = dma.hbm_to_vmem [thread:$0]  %s39, 2048, %s41, [#allocation7], 64, 64, 4
    $region17: #{tpu_custom_call.1} parent=1 // pred_fallthru
      _
    // Predicated region
    $region18: #{tpu_custom_call.1} parent=1 // pred_check
      _
    $region19: #{tpu_custom_call.1} parent=1 // pred_check_branch
      %48 = sbr.rel (0) target = $region21
    $region20: #{tpu_custom_call.1} parent=1 // pred_region
      _
    $region21: #{tpu_custom_call.1} parent=1 // pred_fallthru
      _
    // Predicated region
    $region22: #{tpu_custom_call.1} parent=1 // pred_check
      _
    $region23: #{tpu_custom_call.1} parent=1 // pred_check_branch
      %50 = sbr.rel (0) target = $region25
    $region24: #{tpu_custom_call.1} parent=1 // pred_region
      _
    $region25: #{tpu_custom_call.1} parent=1 // pred_fallthru
      _
    // Predicated region
    $region26: #{tpu_custom_call.1} parent=1 // pred_check
      _
    $region27: #{tpu_custom_call.1} parent=1 // pred_check_branch
      %52 = sbr.rel (0) target = $region29
    $region28: #{tpu_custom_call.1} parent=1 // pred_region
      _
    $region29: #{tpu_custom_call.1} parent=1 // pred_fallthru
      _
    // Predicated region
    $region30: #{tpu_custom_call.1} parent=1 // pred_check
      _
    $region31: #{tpu_custom_call.1} parent=1 // pred_check_branch
      %54 = sbr.rel (0) target = $region33
    $region32: #{tpu_custom_call.1} parent=1 // pred_region
      %56 = dma.done [#allocation4], 256
    $region33: #{tpu_custom_call.1} parent=1 // pred_fallthru
      _
    // Predicated region
    $region34: #{tpu_custom_call.1} parent=1 // pred_check
      _
    $region35: #{tpu_custom_call.1} parent=1 // pred_check_branch
      %58 = sbr.rel (0) target = $region37
    $region36: #{tpu_custom_call.1} parent=1 // pred_region
      %60 = dma.done [#allocation7], 2048
    $region37: #{tpu_custom_call.1} parent=1 // pred_fallthru
      _
    %v62 = vld [vmem:[%s0] sm:$0x1]
    %v63 = vld [vmem:[#allocation3] sm:$0xff]
    %v64 = vld [vmem:[#allocation3 + $0x8] sm:$0x33]
    %v65 = vld [vmem:[%s2] sm:$0x3]
    %v67 = vperm.slane %v65, 0
    %v68 = vperm.slane %v65, 1
    %v73 = vunpack.c.l.b16 %v63
    %v74 = vunpack.c.h.b16 %v63
    %v75 = vunpack.c.l.b16 %v64
    %v76 = vunpack.c.h.b16 %v64
    %v77 = vpack.c.b16 %v75, %v73
    %v78 = vpack.c.b16 %v76, %v74
    %vm79 = vcmask 97280
    %v81 = vsel %vm79, %v62, 0
    %vm83 = vcmask 1045504
    %v85 = vsel %vm83, %v77, 0
    %v88 = vsel %vm83, %v78, 0
    %90 = vmatpush.bf16.msra.mxu0 0
    %91 = vmatpush.bf16.msra.mxu0 0
    %92 = vmatpush.bf16.msra.mxu0 0
    %93 = vmatpush.bf16.msra.mxu0 0
    %94 = vmatpush.bf16.msra.mxu0 0
    %95 = vmatpush.bf16.msra.mxu0 0
    %96 = vmatpush.bf16.msra.mxu0 0
    %97 = vmatpush.bf16.msra.mxu0 %v85
    %98 = vmatmul.bf16.gmra.mxu0 %v81
    %v99 = vpop.f32.mrf.mxu0
    %v100 = vadd.f32 %v67, %v99
    %v101 = vpop.f32.mrf.mxu0
    %102 = vdwg.mxu0
    %103 = vmatpush.bf16.msra.mxu0 0
    %104 = vmatpush.bf16.msra.mxu0 0
    %105 = vmatpush.bf16.msra.mxu0 0
    %106 = vmatpush.bf16.msra.mxu0 0
    %107 = vmatpush.bf16.msra.mxu0 0
    %108 = vmatpush.bf16.msra.mxu0 0
    %109 = vmatpush.bf16.msra.mxu0 0
    %110 = vmatpush.bf16.msra.mxu0 %v88
    %111 = vmatmul.bf16.gmra.mxu0 %v81
    %v112 = vpop.f32.mrf.mxu0
    %v113 = vadd.f32 %v68, %v112
    %v114 = vpop.f32.mrf.mxu0
    %115 = vdwg.mxu0
    %v116 = vmax.f32 %v100, 0.0
    %v117 = vmax.f32 %v113, 0.0
    %v118 = vpack.c.bf16 %v116, %v116
    %v119 = vpack.c.bf16 %v117, %v117
    %v120 = vld [vmem:[#allocation6] sm:$0xf]
    %v121 = vld [vmem:[#allocation6 + $0x4] sm:$0xf]
    %v122 = vld [vmem:[#allocation6 + $0x8] sm:$0xf]
    %v123 = vld [vmem:[#allocation6 + $0xc] sm:$0xf]
    %v124 = vld [vmem:[#allocation6 + $0x10] sm:$0xf]
    %v125 = vld [vmem:[#allocation6 + $0x14] sm:$0xf]
    %v126 = vld [vmem:[#allocation6 + $0x18] sm:$0xf]
    %v127 = vld [vmem:[#allocation6 + $0x1c] sm:$0xf]
    %v128 = vld [vmem:[#allocation6 + $0x20] sm:$0xf]
    %v129 = vld [vmem:[#allocation6 + $0x24] sm:$0xf]
    %v130 = vld [vmem:[#allocation6 + $0x28] sm:$0xf]
    %v131 = vld [vmem:[#allocation6 + $0x2c] sm:$0xf]
    %v132 = vld [vmem:[#allocation6 + $0x30] sm:$0xf]
    %v133 = vld [vmem:[#allocation6 + $0x34] sm:$0xf]
    %v134 = vld [vmem:[#allocation6 + $0x38] sm:$0xf]
    %v135 = vld [vmem:[#allocation6 + $0x3c] sm:$0xf]
    %v136 = vld [vmem:[#allocation6 + $0x40] sm:$0xf]
    %v137 = vld [vmem:[#allocation6 + $0x44] sm:$0xf]
    %v138 = vld [vmem:[#allocation6 + $0x48] sm:$0xf]
    %v139 = vld [vmem:[#allocation6 + $0x4c] sm:$0xf]
    %v140 = vld [vmem:[#allocation6 + $0x50] sm:$0xf]
    %v141 = vld [vmem:[#allocation6 + $0x54] sm:$0xf]
    %v142 = vld [vmem:[#allocation6 + $0x58] sm:$0xf]
    %v143 = vld [vmem:[#allocation6 + $0x5c] sm:$0xf]
    %v144 = vld [vmem:[#allocation6 + $0x60] sm:$0xf]
    %v145 = vld [vmem:[#allocation6 + $0x64] sm:$0xf]
    %v146 = vld [vmem:[#allocation6 + $0x68] sm:$0xf]
    %v147 = vld [vmem:[#allocation6 + $0x6c] sm:$0xf]
    %v148 = vld [vmem:[#allocation6 + $0x70] sm:$0xf]
    %v149 = vld [vmem:[#allocation6 + $0x74] sm:$0xf]
    %v150 = vld [vmem:[#allocation6 + $0x78] sm:$0xf]
    %v151 = vld [vmem:[#allocation6 + $0x7c] sm:$0xf]
    %v152 = vld [vmem:[%s4] sm:$0x1]
    %v154 = vperm.slane %v152, 0
    %v188 = vunpack.c.l.b16 %v120
    %v189 = vunpack.c.l.b16 %v121
    %v190 = vunpack.c.l.b16 %v122
    %v191 = vunpack.c.l.b16 %v123
    %v192 = vunpack.c.l.b16 %v124
    %v193 = vunpack.c.l.b16 %v125
    %v194 = vunpack.c.l.b16 %v126
    %v195 = vunpack.c.l.b16 %v127
    %v196 = vunpack.c.l.b16 %v128
    %v197 = vunpack.c.l.b16 %v129
    %v198 = vunpack.c.l.b16 %v130
    %v199 = vunpack.c.l.b16 %v131
    %v200 = vunpack.c.l.b16 %v132
    %v201 = vunpack.c.l.b16 %v133
    %v202 = vunpack.c.l.b16 %v134
    %v203 = vunpack.c.l.b16 %v135
    %v204 = vunpack.c.l.b16 %v136
    %v205 = vunpack.c.l.b16 %v137
    %v206 = vunpack.c.l.b16 %v138
    %v207 = vunpack.c.l.b16 %v139
    %v208 = vunpack.c.l.b16 %v140
    %v209 = vunpack.c.l.b16 %v141
    %v210 = vunpack.c.l.b16 %v142
    %v211 = vunpack.c.l.b16 %v143
    %v212 = vunpack.c.l.b16 %v144
    %v213 = vunpack.c.l.b16 %v145
    %v214 = vunpack.c.l.b16 %v146
    %v215 = vunpack.c.l.b16 %v147
    %v216 = vunpack.c.l.b16 %v148
    %v217 = vunpack.c.l.b16 %v149
    %v218 = vunpack.c.l.b16 %v150
    %v219 = vunpack.c.l.b16 %v151
    %v220 = vpack.c.b16 %v189, %v188
    %v221 = vpack.c.b16 %v191, %v190
    %v222 = vpack.c.b16 %v193, %v192
    %v223 = vpack.c.b16 %v195, %v194
    %v224 = vpack.c.b16 %v197, %v196
    %v225 = vpack.c.b16 %v199, %v198
    %v226 = vpack.c.b16 %v201, %v200
    %v227 = vpack.c.b16 %v203, %v202
    %v228 = vpack.c.b16 %v205, %v204
    %v229 = vpack.c.b16 %v207, %v206
    %v230 = vpack.c.b16 %v209, %v208
    %v231 = vpack.c.b16 %v211, %v210
    %v232 = vpack.c.b16 %v213, %v212
    %v233 = vpack.c.b16 %v215, %v214
    %v234 = vpack.c.b16 %v217, %v216
    %v235 = vpack.c.b16 %v219, %v218
    %252 = vmatpush.bf16.msra.mxu0 %v227
    %253 = vmatpush.bf16.msra.mxu0 %v226
    %254 = vmatpush.bf16.msra.mxu0 %v225
    %255 = vmatpush.bf16.msra.mxu0 %v224
    %256 = vmatpush.bf16.msra.mxu0 %v223
    %257 = vmatpush.bf16.msra.mxu0 %v222
    %258 = vmatpush.bf16.msra.mxu0 %v221
    %259 = vmatpush.bf16.msra.mxu0 %v220
    %260 = vmatmul.bf16.gmra.mxu0 %v118
    %v261 = vpop.f32.mrf.mxu0
    %v262 = vadd.f32 %v154, %v261
    %v263 = vpop.f32.mrf.mxu0
    %264 = vdwg.mxu0
    %265 = vmatpush.bf16.msra.mxu0 %v235
    %266 = vmatpush.bf16.msra.mxu0 %v234
    %267 = vmatpush.bf16.msra.mxu0 %v233
    %268 = vmatpush.bf16.msra.mxu0 %v232
    %269 = vmatpush.bf16.msra.mxu0 %v231
    %270 = vmatpush.bf16.msra.mxu0 %v230
    %271 = vmatpush.bf16.msra.mxu0 %v229
    %272 = vmatpush.bf16.msra.mxu0 %v228
    %273 = vmatmul.bf16.gmra.mxu0 %v119
    %v274 = vpop.f32.mrf.mxu0
    %v275 = vadd.f32 %v262, %v274
    %v276 = vpop.f32.mrf.mxu0
    %277 = vdwg.mxu0
    %v278 = vmax.f32 %v275, 0.0
    %v279 = vld [vmem:[%s5] sm:$0x1]
    %v281 = vperm.slane %v279, 0
    %v283 = vmul.f32 %v278, %v281
    %vm284 = vcmask 1041408
    %v285 = vsel %vm284, %v283, 0.0
    %286 = vadd.xlane.f32.xlu0 %v285
    %v287 = vpop.xlane.xlu0 %286
    %v288 = vld [vmem:[#allocation2] sm:$0x1]
    %v290 = vperm.slane %v288, 0
    %v292 = vadd.f32 %v287, %v290
    %293 = vxpose.xlu0.b32.start [1/16] %v292, 128
    %294 = vxpose.xlu0.b32.cont [2/16] 0.0, 128
    %295 = vxpose.xlu0.b32.cont [3/16] 0.0, 128
    %296 = vxpose.xlu0.b32.cont [4/16] 0.0, 128
    %297 = vxpose.xlu0.b32.cont [5/16] 0.0, 128
    %298 = vxpose.xlu0.b32.cont [6/16] 0.0, 128
    %299 = vxpose.xlu0.b32.cont [7/16] 0.0, 128
    %300 = vxpose.xlu0.b32.cont [8/16] 0.0, 128
    %301 = vxpose.xlu0.b32.cont [9/16] 0.0, 128
    %302 = vxpose.xlu0.b32.cont [10/16] 0.0, 128
    %303 = vxpose.xlu0.b32.cont [11/16] 0.0, 128
    %304 = vxpose.xlu0.b32.cont [12/16] 0.0, 128
    %305 = vxpose.xlu0.b32.cont [13/16] 0.0, 128
    %306 = vxpose.xlu0.b32.cont [14/16] 0.0, 128
    %307 = vxpose.xlu0.b32.cont [15/16] 0.0, 128
    %308 = vxpose.xlu0.b32.end [16/16] 0.0, 128
    %v309 = vpop.trf.xlu0
    %v310 = vpop.trf.xlu0
    %v311 = vpop.trf.xlu0
    %v312 = vpop.trf.xlu0
    %v313 = vpop.trf.xlu0
    %v314 = vpop.trf.xlu0
    %v315 = vpop.trf.xlu0
    %v316 = vpop.trf.xlu0
    %v317 = vpop.trf.xlu0
    %v318 = vpop.trf.xlu0
    %v319 = vpop.trf.xlu0
    %v320 = vpop.trf.xlu0
    %v321 = vpop.trf.xlu0
    %v322 = vpop.trf.xlu0
    %v323 = vpop.trf.xlu0
    %v324 = vpop.trf.xlu0
    %vm325 = vcmask 8192
    %326 = vst.msk [vmem:[#allocation8] sm:$0x1] %vm325, %v309
    // Predicated region
    $region38: #{tpu_custom_call.1} parent=1 // pred_check
      _
    $region39: #{tpu_custom_call.1} parent=1 // pred_check_branch
      %328 = sbr.rel (0) target = $region41
    $region40: #{tpu_custom_call.1} parent=1 // pred_region
      %330 = vsyncadd [#allocation5], 0
      %s332 = sshll.u32 [#allocation8], 4
      %s333 = int_to_ptr.vmem [resolvable:$true] %s332
      %s334 = sshll.u32 %s7, 4
      %s335 = int_to_ptr.hbm [resolvable:$true] %s334
      %337 = dma.vmem_to_hbm [thread:$0]  %s333, 16, %s335, [#allocation5]
    $region41: #{tpu_custom_call.1} parent=1 // pred_fallthru
      _
    // Predicated region
    $region42: #{tpu_custom_call.1} parent=1 // pred_check
      _
    $region43: #{tpu_custom_call.1} parent=1 // pred_check_branch
      %339 = sbr.rel (0) target = $region45
    $region44: #{tpu_custom_call.1} parent=1 // pred_region
      %341 = dma.done [#allocation5], 16
    $region45: #{tpu_custom_call.1} parent=1 // pred_fallthru
      _
    %342 = vsyncpa [#allocation4], 1
    %343 = vsyncpa [#allocation7], 1
    %344 = vsyncpa [#allocation5], 1

</llo_original>
